<compile_context>
chip_gen: v6e
topology: v6e:2x2x1
jax: 0.10.0
libtpu: 0.0.40
codegen_flags: <defaults>
</compile_context>

<pallas_src>
import math
import jax
import jax.numpy as jnp
from jax import lax
from jax.experimental import pallas as pl
from jax.experimental.pallas import tpu as pltpu

NUM_HEAD = 8
TEMPERATURE = 10.0
EPS = 1e-8  # matches F.cosine_similarity eps


def _round_up(n, m):
    return ((n + m - 1) // m) * m


def _double_adapt_kernel(x_ref, pt_ref, w_ref, b_ref, wm_ref, bm_ref,
                         gp_ref, xad_ref):
    x = x_ref[...]                                   # [TB, F] f32 (true width)
    Pt = pt_ref[...]                                 # [F, H]  f32
    F = x.shape[1]
    H = Pt.shape[1]
    Fo = w_ref.shape[1] // H                         # per-head padded out width

    # --- CosineSimilarityAttention (the module's output), pure f32 ---
    dots = jnp.dot(x, Pt, preferred_element_type=jnp.float32)       # [TB, H]
    x_sq = jnp.sum(x * x, axis=-1, keepdims=True)                   # [TB, 1]
    p_sq = jnp.sum(Pt * Pt, axis=0, keepdims=True)                  # [1, H]
    # PyTorch semantics: clamp the *product* of the norms at eps.
    gate = dots * lax.rsqrt(jnp.maximum(x_sq * p_sq, EPS * EPS))    # EUP rsqrt
    gp_ref[:, 0:H] = gate.astype(gp_ref.dtype)

    # --- softmax over heads with temperature ---
    # gate ∈ [-1, 1] so gate/10 ∈ [-0.1, 0.1]: exp cannot overflow -> no
    # max-subtraction (saves an XLU cross-lane max + broadcast subtract).
    e = jnp.exp(gate * (1.0 / TEMPERATURE))
    attn = e * pl.reciprocal(jnp.sum(e, axis=-1, keepdims=True), approx=True)

    # --- FeatureAdapter: per-head bf16 MXU matmuls on 128-aligned slices of
    #     the resident fused weight ref; mix accumulated in f32 on the VPU ---
    x_bf = x.astype(jnp.bfloat16)
    mix = None
    for h in range(H):                               # static unroll
        y_h = jnp.dot(x_bf, w_ref[:, h * Fo:(h + 1) * Fo],
                      preferred_element_type=jnp.float32)           # [TB, Fo]
        t = attn[:, h:h + 1] * y_h
        mix = t if mix is None else mix + t
    bias_mix = jnp.dot(attn.astype(jnp.bfloat16), b_ref[...],
                       preferred_element_type=jnp.float32)          # [TB, F]
    acc = x + bias_mix + mix[:, 0:F]                 # padded cols of mix are 0
    xad_ref[...] = acc.astype(xad_ref.dtype)

    # --- base forecast Linear(F -> 1): VPU multiply + lane reduce ---
    pred = jnp.sum(acc * wm_ref[...], axis=-1, keepdims=True) + bm_ref[0]
    gp_ref[:, H:H + 1] = pred.astype(gp_ref.dtype)


def prepare_params(P, W, b, Wm, bm):
    """One-time layout prep (pad / transpose / cast params once, not per call)."""
    f32 = jnp.float32
    H, F = P.shape
    Fo = _round_up(F, 128)                            # per-head output width
    Pt = jnp.asarray(P, f32).T                        # [F, H]
    # nn.Linear: y_h = x @ W[h].T + b[h]  ->  per-head RHS block = W[h].T
    Wt = jnp.transpose(jnp.asarray(W, f32), (0, 2, 1))            # [H, F, F]
    Wt = jnp.pad(Wt, ((0, 0), (0, 0), (0, Fo - F)))               # [H, F, Fo]
    W_all = jnp.transpose(Wt, (1, 0, 2)).reshape(F, H * Fo)
    W_all = W_all.astype(jnp.bfloat16)                            # [F, H*Fo]
    b_bf = jnp.asarray(b, jnp.bfloat16)                           # [H, F]
    wm_row = jnp.asarray(Wm, f32).reshape(1, F)                   # [1, F]
    bm_s = jnp.asarray(bm, f32).reshape(1)                        # SMEM scalar
    return Pt, W_all, b_bf, wm_row, bm_s


def double_adapt_forward(x, prepared, *, batch_tile=512,
                         x_adapt_dtype=jnp.float32):
    """Returns (gate, pred, x_adapt).

    gate == CosineSimilarityAttention.forward(x); pred / x_adapt are the
    DoubleAdapt forward outputs.  x may be [B, F] or [B, S, F].
    """
    Pt, W_all, b_bf, wm_row, bm_s = prepared
    orig_shape = x.shape
    if x.ndim == 3:
        x = x.reshape(-1, x.shape[-1])                # [B,S,F] -> [B*S,F]
    B, F = x.shape
    Fh, H = Pt.shape
    assert F == Fh, "feature_dim mismatch"
    Fo = W_all.shape[1] // H

    # Batch tiling: balance tiles to B (no dead full tiles), keep >=2 grid
    # steps when possible so ("parallel",) shards across v7x's 2 TensorCores.
    n_steps = max(pl.cdiv(B, batch_tile), 2 if B > 8 else 1)
    TB = max(8, _round_up(pl.cdiv(B, n_steps), 8))
    grid = (pl.cdiv(B, TB),)

    gp, xad = pl.pallas_call(
        _double_adapt_kernel,
        grid=grid,
        out_shape=(
            jax.ShapeDtypeStruct((B, H + 1), jnp.float32),   # gate | pred packed
            jax.ShapeDtypeStruct((B, F), x_adapt_dtype),     # x_adapt, true width
        ),
        in_specs=[
            pl.BlockSpec((TB, F), lambda i: (i, 0)),          # x tile
            pl.BlockSpec((Fh, H), lambda i: (0, 0)),          # Pt (resident)
            pl.BlockSpec((Fh, H * Fo), lambda i: (0, 0)),     # W_all (resident)
            pl.BlockSpec((H, F), lambda i: (0, 0)),           # b (resident)
            pl.BlockSpec((1, F), lambda i: (0, 0)),           # Wm row (resident)
            pl.BlockSpec(memory_space=pltpu.MemorySpace.SMEM),  # bm scalar
        ],
        out_specs=(
            pl.BlockSpec((TB, H + 1), lambda i: (i, 0)),
            pl.BlockSpec((TB, F), lambda i: (i, 0)),
        ),
        compiler_params=pltpu.CompilerParams(
            dimension_semantics=("parallel",)),
    )(x.astype(jnp.float32), Pt, W_all, b_bf, wm_row, bm_s)

    gate = gp[:, :H]
    pred = gp[:, H:H + 1]
    if len(orig_shape) == 3:
        B0, S0, _ = orig_shape
        gate = gate.reshape(B0, S0, H)
        pred = pred.reshape(B0, S0, 1)
        xad = xad.reshape(B0, S0, F)
    return gate, pred, xad


def reference_forward(x, P, W, b, Wm, bm):
    """Pure-JAX f32 reference of the module semantics (2-D or 3-D input)."""
    x32 = x.astype(jnp.float32)
    P32 = P.astype(jnp.float32)
    dots = x32 @ P32.T
    xn2 = jnp.sum(x32 * x32, axis=-1, keepdims=True)
    pn2 = jnp.sum(P32 * P32, axis=-1)
    gate = dots / jnp.sqrt(jnp.maximum(xn2 * pn2, EPS * EPS))  # PyTorch eps rule
    attn = jax.nn.softmax(gate / TEMPERATURE, axis=-1)
    y = jnp.einsum('...i,hoi->...ho', x32, W.astype(jnp.float32))   # x @ W[h].T
    acc = x32 + jnp.einsum('...h,...hf->...f', attn, y + b.astype(jnp.float32))
    pred = acc @ Wm.astype(jnp.float32) + bm.astype(jnp.float32)
    return gate, pred, acc


def init_params(key, feature_dim, num_head):
    """Deterministic param init mimicking the PyTorch module shapes."""
    k1, k2, k3, k4, k5 = jax.random.split(key, 5)
    bound = 1.0 / math.sqrt(feature_dim)   # kaiming_uniform_(a=sqrt(5)) bound
    P = jax.random.uniform(k1, (num_head, feature_dim), jnp.float32, -bound, bound)
    W = jax.random.uniform(k2, (num_head, feature_dim, feature_dim), jnp.float32, -bound, bound)
    b = jax.random.uniform(k3, (num_head, feature_dim), jnp.float32, -bound, bound)
    Wm = jax.random.uniform(k4, (feature_dim, 1), jnp.float32, -bound, bound)
    bm = jax.random.uniform(k5, (1, 1), jnp.float32, -bound, bound)
    return P, W, b, Wm, bm
    # TODO(synk): LabelAdapter / LabelAdaptHeads are training-time label
    # adaptation only, not part of this forward pass, so they are not ported.


if __name__ == "__main__":
    B, F = 8, 32
    key = jax.random.PRNGKey(0)
    kx, kp, k3, k4 = jax.random.split(key, 4)
    x = jax.random.normal(kx, (B, F), jnp.float32)
    P, W, b, Wm, bm = init_params(kp, F, NUM_HEAD)
    prepared = prepare_params(P, W, b, Wm, bm)   # layout prep done ONCE

    gate, pred, x_adapt = double_adapt_forward(x, prepared)
    jax.block_until_ready((gate, pred, x_adapt))

    g_ref, p_ref, a_ref = reference_forward(x, P, W, b, Wm, bm)
    assert gate.shape == (B, NUM_HEAD)
    # Cosine-sim gate path is pure f32 in-kernel -> tight tolerance.
    assert jnp.allclose(gate, g_ref, atol=1e-4, rtol=1e-4), "gate mismatch"
    # FeatureAdapter uses bf16 MXU inputs (f32 accumulate) -> bf16-level tol.
    assert jnp.allclose(x_adapt, a_ref, atol=2e-2, rtol=2e-2), "x_adapt mismatch"
    assert jnp.allclose(pred, p_ref, atol=2e-2, rtol=2e-2), "pred mismatch"

    # 3-D input path of CosineSimilarityAttention ([batch, seq, feature])
    x3 = jax.random.normal(k3, (2, 4, F), jnp.float32)
    gate3, pred3, x_adapt3 = double_adapt_forward(x3, prepared)
    jax.block_until_ready((gate3, pred3, x_adapt3))
    g3_ref, p3_ref, a3_ref = reference_forward(x3, P, W, b, Wm, bm)
    assert gate3.shape == (2, 4, NUM_HEAD)
    assert jnp.allclose(gate3, g3_ref, atol=1e-4, rtol=1e-4), "gate3 mismatch"
    assert jnp.allclose(x_adapt3, a3_ref, atol=2e-2, rtol=2e-2), "x_adapt3 mismatch"
    assert jnp.allclose(pred3, p3_ref, atol=2e-2, rtol=2e-2), "pred3 mismatch"

    # Ragged batch (not a multiple of the tile): exercises cdiv grid + masked
    # last block with no wrapper-side padding/slicing.
    x13 = jax.random.normal(k4, (13, F), jnp.float32)
    gate13, pred13, xad13 = double_adapt_forward(x13, prepared)
    jax.block_until_ready((gate13, pred13, xad13))
    g13, p13, a13 = reference_forward(x13, P, W, b, Wm, bm)
    assert jnp.allclose(gate13, g13, atol=1e-4, rtol=1e-4), "ragged gate mismatch"
    assert jnp.allclose(xad13, a13, atol=2e-2, rtol=2e-2), "ragged x_adapt mismatch"
    assert jnp.allclose(pred13, p13, atol=2e-2, rtol=2e-2), "ragged pred mismatch"

    print("KERNEL_OK")
</pallas_src>

<mosaic_0001>
module attributes {stable_mosaic.version = 11 : i64} {
  func.func @_double_adapt_kernel(%arg0: i32, %arg1: memref<8x32xf32, #tpu.memory_space<vmem>>, %arg2: memref<32x8xf32, #tpu.memory_space<vmem>>, %arg3: memref<32x1024xbf16, #tpu.memory_space<vmem>>, %arg4: memref<8x32xbf16, #tpu.memory_space<vmem>>, %arg5: memref<1x32xf32, #tpu.memory_space<vmem>>, %arg6: memref<1xf32, #tpu.memory_space<smem>>, %arg7: memref<8x9xf32, #tpu.memory_space<vmem>>, %arg8: memref<8x32xf32, #tpu.memory_space<vmem>>) attributes {dimension_semantics = [#tpu.dimension_semantics<parallel>], iteration_bounds = array<i64: 1>, scalar_prefetch = 0 : i64, scratch_operands = 0 : i64, tpu.core_type = #tpu.core_type<tc>, window_params = [{transform_indices = @transform_0, window_bounds = array<i64: 8, 32>}, {pipeline_mode = #tpu.pipeline_mode<synchronous>, transform_indices = @transform_1, window_bounds = array<i64: 32, 8>}, {pipeline_mode = #tpu.pipeline_mode<synchronous>, transform_indices = @transform_2, window_bounds = array<i64: 32, 1024>}, {pipeline_mode = #tpu.pipeline_mode<synchronous>, transform_indices = @transform_3, window_bounds = array<i64: 8, 32>}, {pipeline_mode = #tpu.pipeline_mode<synchronous>, transform_indices = @transform_4, window_bounds = array<i64: 1, 32>}, {transform_indices = @transform_5, window_bounds = array<i64: 1>}, {transform_indices = @transform_6, window_bounds = array<i64: 8, 9>}, {transform_indices = @transform_7, window_bounds = array<i64: 8, 32>}]} {
    %c0 = arith.constant 0 : index
    %c0_0 = arith.constant 0 : index
    %0 = vector.load %arg1[%c0, %c0_0] : memref<8x32xf32, #tpu.memory_space<vmem>>, vector<8x32xf32>
    %c0_1 = arith.constant 0 : index
    %c0_2 = arith.constant 0 : index
    %1 = vector.load %arg2[%c0_1, %c0_2] : memref<32x8xf32, #tpu.memory_space<vmem>>, vector<32x8xf32>
    %cst = arith.constant dense<0.000000e+00> : vector<8x8xf32>
    %2 = tpu.matmul %0, %1, %cst {dimension_numbers = #tpu.dot_dimension_numbers<[1], [0], [0], [1], [0, 0, 1, 1], [], []>} : vector<8x32xf32>, vector<32x8xf32>, vector<8x8xf32> -> vector<8x8xf32>
    %3 = arith.mulf %0, %0 : vector<8x32xf32>
    %cst_3 = arith.constant dense<0.000000e+00> : vector<8xf32>
    %4 = vector.multi_reduction <add>, %3, %cst_3 [1] : vector<8x32xf32> to vector<8xf32>
    %5 = vector.shape_cast %4 : vector<8xf32> to vector<8x1xf32>
    %6 = arith.mulf %1, %1 : vector<32x8xf32>
    %cst_4 = arith.constant dense<0.000000e+00> : vector<8xf32>
    %7 = vector.multi_reduction <add>, %6, %cst_4 [0] : vector<32x8xf32> to vector<8xf32>
    %8 = vector.shape_cast %7 : vector<8xf32> to vector<1x8xf32>
    %9 = vector.broadcast %5 : vector<8x1xf32> to vector<8x8xf32>
    %10 = vector.broadcast %8 : vector<1x8xf32> to vector<8x8xf32>
    %11 = arith.mulf %9, %10 : vector<8x8xf32>
    %cst_5 = arith.constant 1.000000e-16 : f32
    %12 = vector.broadcast %cst_5 : f32 to vector<8x8xf32>
    %13 = arith.maximumf %11, %12 : vector<8x8xf32>
    %14 = math.rsqrt %13 : vector<8x8xf32>
    %15 = arith.mulf %2, %14 : vector<8x8xf32>
    %c0_6 = arith.constant 0 : index
    %c0_7 = arith.constant 0 : index
    %16 = vector.load %arg7[%c0_6, %c0_7] : memref<8x9xf32, #tpu.memory_space<vmem>>, vector<8x8xf32>
    tpu.vector_store %arg7[%c0_6, %c0_7], %15 {strides = array<i32>} : memref<8x9xf32, #tpu.memory_space<vmem>>, vector<8x8xf32>,
    %cst_8 = arith.constant 1.000000e-01 : f32
    %17 = vector.broadcast %cst_8 : f32 to vector<8x8xf32>
    %18 = arith.mulf %15, %17 : vector<8x8xf32>
    %19 = math.exp %18 : vector<8x8xf32>
    %cst_9 = arith.constant dense<0.000000e+00> : vector<8xf32>
    %20 = vector.multi_reduction <add>, %19, %cst_9 [1] : vector<8x8xf32> to vector<8xf32>
    %21 = vector.shape_cast %20 : vector<8xf32> to vector<8x1xf32>
    %22 = tpu.reciprocal %21 {approx = true} : vector<8x1xf32> -> vector<8x1xf32>
    %23 = vector.broadcast %22 : vector<8x1xf32> to vector<8x8xf32>
    %24 = arith.mulf %19, %23 : vector<8x8xf32>
    %25 = arith.truncf %0 : vector<8x32xf32> to vector<8x32xbf16>
    %c0_10 = arith.constant 0 : index
    %c0_11 = arith.constant 0 : index
    %26 = vector.load %arg3[%c0_10, %c0_11] : memref<32x1024xbf16, #tpu.memory_space<vmem>>, vector<32x128xbf16>
    %cst_12 = arith.constant dense<0.000000e+00> : vector<8x128xf32>
    %27 = tpu.matmul %25, %26, %cst_12 {dimension_numbers = #tpu.dot_dimension_numbers<[1], [0], [0], [1], [0, 0, 1, 1], [], []>} : vector<8x32xbf16>, vector<32x128xbf16>, vector<8x128xf32> -> vector<8x128xf32>
    %28 = vector.extract_strided_slice %24 {offsets = [0, 0], sizes = [8, 1], strides = [1, 1]} : vector<8x8xf32> to vector<8x1xf32>
    %29 = vector.broadcast %28 : vector<8x1xf32> to vector<8x128xf32>
    %30 = arith.mulf %29, %27 : vector<8x128xf32>
    %c0_13 = arith.constant 0 : index
    %c128 = arith.constant 128 : index
    %31 = vector.load %arg3[%c0_13, %c128] : memref<32x1024xbf16, #tpu.memory_space<vmem>>, vector<32x128xbf16>
    %cst_14 = arith.constant dense<0.000000e+00> : vector<8x128xf32>
    %32 = tpu.matmul %25, %31, %cst_14 {dimension_numbers = #tpu.dot_dimension_numbers<[1], [0], [0], [1], [0, 0, 1, 1], [], []>} : vector<8x32xbf16>, vector<32x128xbf16>, vector<8x128xf32> -> vector<8x128xf32>
    %33 = vector.extract_strided_slice %24 {offsets = [0, 1], sizes = [8, 1], strides = [1, 1]} : vector<8x8xf32> to vector<8x1xf32>
    %34 = vector.broadcast %33 : vector<8x1xf32> to vector<8x128xf32>
    %35 = arith.mulf %34, %32 : vector<8x128xf32>
    %36 = arith.addf %30, %35 : vector<8x128xf32>
    %c0_15 = arith.constant 0 : index
    %c256 = arith.constant 256 : index
    %37 = vector.load %arg3[%c0_15, %c256] : memref<32x1024xbf16, #tpu.memory_space<vmem>>, vector<32x128xbf16>
    %cst_16 = arith.constant dense<0.000000e+00> : vector<8x128xf32>
    %38 = tpu.matmul %25, %37, %cst_16 {dimension_numbers = #tpu.dot_dimension_numbers<[1], [0], [0], [1], [0, 0, 1, 1], [], []>} : vector<8x32xbf16>, vector<32x128xbf16>, vector<8x128xf32> -> vector<8x128xf32>
    %39 = vector.extract_strided_slice %24 {offsets = [0, 2], sizes = [8, 1], strides = [1, 1]} : vector<8x8xf32> to vector<8x1xf32>
    %40 = vector.broadcast %39 : vector<8x1xf32> to vector<8x128xf32>
    %41 = arith.mulf %40, %38 : vector<8x128xf32>
    %42 = arith.addf %36, %41 : vector<8x128xf32>
    %c0_17 = arith.constant 0 : index
    %c384 = arith.constant 384 : index
    %43 = vector.load %arg3[%c0_17, %c384] : memref<32x1024xbf16, #tpu.memory_space<vmem>>, vector<32x128xbf16>
    %cst_18 = arith.constant dense<0.000000e+00> : vector<8x128xf32>
    %44 = tpu.matmul %25, %43, %cst_18 {dimension_numbers = #tpu.dot_dimension_numbers<[1], [0], [0], [1], [0, 0, 1, 1], [], []>} : vector<8x32xbf16>, vector<32x128xbf16>, vector<8x128xf32> -> vector<8x128xf32>
    %45 = vector.extract_strided_slice %24 {offsets = [0, 3], sizes = [8, 1], strides = [1, 1]} : vector<8x8xf32> to vector<8x1xf32>
    %46 = vector.broadcast %45 : vector<8x1xf32> to vector<8x128xf32>
    %47 = arith.mulf %46, %44 : vector<8x128xf32>
    %48 = arith.addf %42, %47 : vector<8x128xf32>
    %c0_19 = arith.constant 0 : index
    %c512 = arith.constant 512 : index
    %49 = vector.load %arg3[%c0_19, %c512] : memref<32x1024xbf16, #tpu.memory_space<vmem>>, vector<32x128xbf16>
    %cst_20 = arith.constant dense<0.000000e+00> : vector<8x128xf32>
    %50 = tpu.matmul %25, %49, %cst_20 {dimension_numbers = #tpu.dot_dimension_numbers<[1], [0], [0], [1], [0, 0, 1, 1], [], []>} : vector<8x32xbf16>, vector<32x128xbf16>, vector<8x128xf32> -> vector<8x128xf32>
    %51 = vector.extract_strided_slice %24 {offsets = [0, 4], sizes = [8, 1], strides = [1, 1]} : vector<8x8xf32> to vector<8x1xf32>
    %52 = vector.broadcast %51 : vector<8x1xf32> to vector<8x128xf32>
    %53 = arith.mulf %52, %50 : vector<8x128xf32>
    %54 = arith.addf %48, %53 : vector<8x128xf32>
    %c0_21 = arith.constant 0 : index
    %c640 = arith.constant 640 : index
    %55 = vector.load %arg3[%c0_21, %c640] : memref<32x1024xbf16, #tpu.memory_space<vmem>>, vector<32x128xbf16>
    %cst_22 = arith.constant dense<0.000000e+00> : vector<8x128xf32>
    %56 = tpu.matmul %25, %55, %cst_22 {dimension_numbers = #tpu.dot_dimension_numbers<[1], [0], [0], [1], [0, 0, 1, 1], [], []>} : vector<8x32xbf16>, vector<32x128xbf16>, vector<8x128xf32> -> vector<8x128xf32>
    %57 = vector.extract_strided_slice %24 {offsets = [0, 5], sizes = [8, 1], strides = [1, 1]} : vector<8x8xf32> to vector<8x1xf32>
    %58 = vector.broadcast %57 : vector<8x1xf32> to vector<8x128xf32>
    %59 = arith.mulf %58, %56 : vector<8x128xf32>
    %60 = arith.addf %54, %59 : vector<8x128xf32>
    %c0_23 = arith.constant 0 : index
    %c768 = arith.constant 768 : index
    %61 = vector.load %arg3[%c0_23, %c768] : memref<32x1024xbf16, #tpu.memory_space<vmem>>, vector<32x128xbf16>
    %cst_24 = arith.constant dense<0.000000e+00> : vector<8x128xf32>
    %62 = tpu.matmul %25, %61, %cst_24 {dimension_numbers = #tpu.dot_dimension_numbers<[1], [0], [0], [1], [0, 0, 1, 1], [], []>} : vector<8x32xbf16>, vector<32x128xbf16>, vector<8x128xf32> -> vector<8x128xf32>
    %63 = vector.extract_strided_slice %24 {offsets = [0, 6], sizes = [8, 1], strides = [1, 1]} : vector<8x8xf32> to vector<8x1xf32>
    %64 = vector.broadcast %63 : vector<8x1xf32> to vector<8x128xf32>
    %65 = arith.mulf %64, %62 : vector<8x128xf32>
    %66 = arith.addf %60, %65 : vector<8x128xf32>
    %c0_25 = arith.constant 0 : index
    %c896 = arith.constant 896 : index
    %67 = vector.load %arg3[%c0_25, %c896] : memref<32x1024xbf16, #tpu.memory_space<vmem>>, vector<32x128xbf16>
    %cst_26 = arith.constant dense<0.000000e+00> : vector<8x128xf32>
    %68 = tpu.matmul %25, %67, %cst_26 {dimension_numbers = #tpu.dot_dimension_numbers<[1], [0], [0], [1], [0, 0, 1, 1], [], []>} : vector<8x32xbf16>, vector<32x128xbf16>, vector<8x128xf32> -> vector<8x128xf32>
    %69 = vector.extract_strided_slice %24 {offsets = [0, 7], sizes = [8, 1], strides = [1, 1]} : vector<8x8xf32> to vector<8x1xf32>
    %70 = vector.broadcast %69 : vector<8x1xf32> to vector<8x128xf32>
    %71 = arith.mulf %70, %68 : vector<8x128xf32>
    %72 = arith.addf %66, %71 : vector<8x128xf32>
    %73 = arith.truncf %24 : vector<8x8xf32> to vector<8x8xbf16>
    %c0_27 = arith.constant 0 : index
    %c0_28 = arith.constant 0 : index
    %74 = vector.load %arg4[%c0_27, %c0_28] : memref<8x32xbf16, #tpu.memory_space<vmem>>, vector<8x32xbf16>
    %cst_29 = arith.constant dense<0.000000e+00> : vector<8x32xf32>
    %75 = tpu.matmul %73, %74, %cst_29 {dimension_numbers = #tpu.dot_dimension_numbers<[1], [0], [0], [1], [0, 0, 1, 1], [], []>} : vector<8x8xbf16>, vector<8x32xbf16>, vector<8x32xf32> -> vector<8x32xf32>
    %76 = arith.addf %0, %75 : vector<8x32xf32>
    %77 = vector.extract_strided_slice %72 {offsets = [0, 0], sizes = [8, 32], strides = [1, 1]} : vector<8x128xf32> to vector<8x32xf32>
    %78 = arith.addf %76, %77 : vector<8x32xf32>
    %c0_30 = arith.constant 0 : index
    %c0_31 = arith.constant 0 : index
    %79 = vector.load %arg8[%c0_30, %c0_31] : memref<8x32xf32, #tpu.memory_space<vmem>>, vector<8x32xf32>
    tpu.vector_store %arg8[%c0_30, %c0_31], %78 {strides = array<i32>} : memref<8x32xf32, #tpu.memory_space<vmem>>, vector<8x32xf32>,
    %c0_32 = arith.constant 0 : index
    %c0_33 = arith.constant 0 : index
    %80 = vector.load %arg5[%c0_32, %c0_33] : memref<1x32xf32, #tpu.memory_space<vmem>>, vector<1x32xf32>
    %81 = vector.broadcast %80 : vector<1x32xf32> to vector<8x32xf32>
    %82 = arith.mulf %78, %81 : vector<8x32xf32>
    %cst_34 = arith.constant dense<0.000000e+00> : vector<8xf32>
    %83 = vector.multi_reduction <add>, %82, %cst_34 [1] : vector<8x32xf32> to vector<8xf32>
    %84 = vector.shape_cast %83 : vector<8xf32> to vector<8x1xf32>
    %c0_35 = arith.constant 0 : index
    %85 = memref.load %arg6[%c0_35] : memref<1xf32, #tpu.memory_space<smem>>
    %86 = vector.broadcast %85 : f32 to vector<8x1xf32>
    %87 = arith.addf %84, %86 : vector<8x1xf32>
    %c0_36 = arith.constant 0 : index
    %c8 = arith.constant 8 : index
    %88 = vector.load %arg7[%c0_36, %c8] : memref<8x9xf32, #tpu.memory_space<vmem>>, vector<8x1xf32>
    tpu.vector_store %arg7[%c0_36, %c8], %87 {strides = array<i32>} : memref<8x9xf32, #tpu.memory_space<vmem>>, vector<8x1xf32>,
    return
  }
  func.func @transform_0(%arg0: i32) -> (i32, i32) {
    %c0_i32 = arith.constant 0 : i32
    %c0_i32_0 = arith.constant 0 : i32
    return %arg0, %c0_i32 : i32, i32
  }
  func.func @transform_1(%arg0: i32) -> (i32, i32) {
    %c0_i32 = arith.constant 0 : i32
    %c0_i32_0 = arith.constant 0 : i32
    %c0_i32_1 = arith.constant 0 : i32
    return %c0_i32, %c0_i32_0 : i32, i32
  }
  func.func @transform_2(%arg0: i32) -> (i32, i32) {
    %c0_i32 = arith.constant 0 : i32
    %c0_i32_0 = arith.constant 0 : i32
    %c0_i32_1 = arith.constant 0 : i32
    return %c0_i32, %c0_i32_0 : i32, i32
  }
  func.func @transform_3(%arg0: i32) -> (i32, i32) {
    %c0_i32 = arith.constant 0 : i32
    %c0_i32_0 = arith.constant 0 : i32
    %c0_i32_1 = arith.constant 0 : i32
    return %c0_i32, %c0_i32_0 : i32, i32
  }
  func.func @transform_4(%arg0: i32) -> (i32, i32) {
    %c0_i32 = arith.constant 0 : i32
    %c0_i32_0 = arith.constant 0 : i32
    %c0_i32_1 = arith.constant 0 : i32
    return %c0_i32, %c0_i32_0 : i32, i32
  }
  func.func @transform_5(%arg0: i32) -> i32 {
    %c0_i32 = arith.constant 0 : i32
    %c0_i32_0 = arith.constant 0 : i32
    return %c0_i32 : i32
  }
  func.func @transform_6(%arg0: i32) -> (i32, i32) {
    %c0_i32 = arith.constant 0 : i32
    %c0_i32_0 = arith.constant 0 : i32
    return %arg0, %c0_i32 : i32, i32
  }
  func.func @transform_7(%arg0: i32) -> (i32, i32) {
    %c0_i32 = arith.constant 0 : i32
    %c0_i32_0 = arith.constant 0 : i32
    return %arg0, %c0_i32 : i32, i32
  }
}

</mosaic_0001>

<llo_original>
// kernel: tpu_custom_call.1
$region0: #{tpu_custom_call.1}
  #allocation0 [shape = 'u32[]', space=smem, size = 0x4, offset = 0x4, fixed_abs, tag = 'smem constant byte address 0x4 - core index']
  #allocation1 [shape = 'u32[144,128]{1,0:T(1,128)}', space=vmem, size = 0x12000, scoped, tag = 'internal scratch']
  #allocation2 [shape = 'f32[1]{0:T(128)S(6)}', space=smem, size = 0x200, scoped, tag = 'scoped memory for tpu_custom_call.1']
  %s0 = inlined_call_operand.vmem [shape: f32[8,32], index: 0, kind: input, shape index: {}]
  %s1 = inlined_call_operand.vmem [shape: f32[32,8], index: 1, kind: input, shape index: {}]
  %s2 = inlined_call_operand.hbm [shape: bf16[32,1024], index: 2, kind: input, shape index: {}]
  %s3 = inlined_call_operand.vmem [shape: bf16[8,32], index: 3, kind: input, shape index: {}]
  %s4 = inlined_call_operand.vmem [shape: f32[1,32], index: 4, kind: input, shape index: {}]
  %s5 = inlined_call_operand.<no memory space> [shape: f32[1], index: 5, kind: input, shape index: {}]
  %s6 = inlined_call_operand.hbm [shape: f32[8,9], index: 6, kind: output, shape index: {0}]
  %s7 = inlined_call_operand.hbm [shape: f32[8,32], index: 7, kind: output, shape index: {1}]
  %8 = xla_tuple %s6, %s7
  %s9 = sld [smem:[#allocation0]]
  $region46: #{tpu_custom_call.1} parent=0
    _
  %s11 = ssub.s32 1, %s9
  %s12 = scalar_select 0, %s11, %s9
  %13 = sst [smem:[#allocation2]] %s5
  $region1: #{tpu_custom_call.1} parent=0
    #allocation3 [shape = 'u8[65536]{0}', space=vmem, size = 0x10000, scoped, tag = 'input window, operand 2, single buffered']
    #allocation4 [shape = 's32[1]{0}', space=sflag, size = 0x4, scoped, tag = 'scoped memory for tpu_custom_call.1']
    #allocation5 [shape = 's32[1]{0}', space=sflag, size = 0x4, scoped, tag = 'scoped memory for tpu_custom_call.1']
    #allocation6 [shape = 'u8[4096]{0}', space=vmem, size = 0x1000, scoped, tag = 'output window, operand 0, single buffered']
    #allocation7 [shape = 'u8[4096]{0}', space=vmem, size = 0x1000, scoped, tag = 'output window, operand 1, single buffered']
    #allocation8 [shape = 's32[1]{0}', space=sflag, size = 0x4, scoped, tag = 'scoped memory for tpu_custom_call.1']
    %14 = vsyncpa [#allocation4], 0
    %15 = vsyncpa [#allocation5], 0
    %16 = vsyncpa [#allocation8], 0
    // Predicated region
    $region2: #{tpu_custom_call.1} parent=1 // pred_check
      _
    $region3: #{tpu_custom_call.1} parent=1 // pred_check_branch
      %18 = sbr.rel (0) target = $region5
    $region4: #{tpu_custom_call.1} parent=1 // pred_region
      _
    $region5: #{tpu_custom_call.1} parent=1 // pred_fallthru
      _
    // Predicated region
    $region6: #{tpu_custom_call.1} parent=1 // pred_check
      _
    $region7: #{tpu_custom_call.1} parent=1 // pred_check_branch
      %20 = sbr.rel (0) target = $region9
    $region8: #{tpu_custom_call.1} parent=1 // pred_region
      _
    $region9: #{tpu_custom_call.1} parent=1 // pred_fallthru
      _
    // Predicated region
    $region10: #{tpu_custom_call.1} parent=1 // pred_check
      _
    $region11: #{tpu_custom_call.1} parent=1 // pred_check_branch
      %22 = sbr.rel (0) target = $region13
    $region12: #{tpu_custom_call.1} parent=1 // pred_region
      %s24 = ssub.s32 2048, 2048
      %25 = vsyncadd [#allocation4], %s24
      %s26 = sshll.u32 [#allocation3], 4
      %s27 = int_to_ptr.vmem [resolvable:$true] %s26
      %32 = dma.hbm_to_vmem [thread:$0]  %s2, 2048, %s27, [#allocation4], 512, 512, 32
    $region13: #{tpu_custom_call.1} parent=1 // pred_fallthru
      _
    // Predicated region
    $region14: #{tpu_custom_call.1} parent=1 // pred_check
      _
    $region15: #{tpu_custom_call.1} parent=1 // pred_check_branch
      %34 = sbr.rel (0) target = $region17
    $region16: #{tpu_custom_call.1} parent=1 // pred_region
      _
    $region17: #{tpu_custom_call.1} parent=1 // pred_fallthru
      _
    // Predicated region
    $region18: #{tpu_custom_call.1} parent=1 // pred_check
      _
    $region19: #{tpu_custom_call.1} parent=1 // pred_check_branch
      %36 = sbr.rel (0) target = $region21
    $region20: #{tpu_custom_call.1} parent=1 // pred_region
      _
    $region21: #{tpu_custom_call.1} parent=1 // pred_fallthru
      _
    // Predicated region
    $region22: #{tpu_custom_call.1} parent=1 // pred_check
      _
    $region23: #{tpu_custom_call.1} parent=1 // pred_check_branch
      %38 = sbr.rel (0) target = $region25
    $region24: #{tpu_custom_call.1} parent=1 // pred_region
      _
    $region25: #{tpu_custom_call.1} parent=1 // pred_fallthru
      _
    // Predicated region
    $region26: #{tpu_custom_call.1} parent=1 // pred_check
      _
    $region27: #{tpu_custom_call.1} parent=1 // pred_check_branch
      %40 = sbr.rel (0) target = $region29
    $region28: #{tpu_custom_call.1} parent=1 // pred_region
      %41 = dma.done [#allocation4], 2048
    $region29: #{tpu_custom_call.1} parent=1 // pred_fallthru
      _
    %v43 = vld [vmem:[%s0] sm:$0xff]
    %v44 = vld [vmem:[%s1] sm:$0xff]
    %v45 = vld [vmem:[%s1 + $0x8] sm:$0xff]
    %v46 = vld [vmem:[%s1 + $0x10] sm:$0xff]
    %v47 = vld [vmem:[%s1 + $0x18] sm:$0xff]
    %vm48 = vcmask 261120
    %v50 = vsel %vm48, %v43, 0
    %52 = vmatprep.subr.mxu0 0.0
    %53 = vmatpush1.msra.mxu0 0.0
    %54 = vmatprep.subr.mxu0 0.0
    %55 = vmatpush1.msra.mxu0 0.0
    %56 = vmatprep.subr.mxu0 0.0
    %57 = vmatpush1.msra.mxu0 0.0
    %58 = vmatprep.subr.mxu0 0.0
    %59 = vmatpush1.msra.mxu0 0.0
    %60 = vmatprep.subr.mxu0 0.0
    %61 = vmatpush1.msra.mxu0 0.0
    %62 = vmatprep.subr.mxu0 0.0
    %63 = vmatpush1.msra.mxu0 0.0
    %64 = vmatprep.subr.mxu0 0.0
    %65 = vmatpush1.msra.mxu0 0.0
    %66 = vmatprep.subr.mxu0 0.0
    %67 = vmatpush1.msra.mxu0 0.0
    %68 = vmatprep.subr.mxu0 0.0
    %69 = vmatpush1.msra.mxu0 0.0
    %70 = vmatprep.subr.mxu0 0.0
    %71 = vmatpush1.msra.mxu0 0.0
    %72 = vmatprep.subr.mxu0 0.0
    %73 = vmatpush1.msra.mxu0 0.0
    %74 = vmatprep.subr.mxu0 0.0
    %75 = vmatpush1.msra.mxu0 0.0
    %76 = vmatprep.subr.mxu0 0.0
    %77 = vmatpush1.msra.mxu0 %v47
    %78 = vmatprep.subr.mxu0 0.0
    %79 = vmatpush1.msra.mxu0 %v46
    %80 = vmatprep.subr.mxu0 0.0
    %81 = vmatpush1.msra.mxu0 %v45
    %82 = vmatprep.subr.mxu0 0.0
    %83 = vmatpush1.msra.mxu0 %v44
    %84 = vmatprep.subr.mxu0 0.0
    %85 = vmatpush2.msra.mxu0 0.0
    %86 = vmatprep.subr.mxu0 0.0
    %87 = vmatpush2.msra.mxu0 0.0
    %88 = vmatprep.subr.mxu0 0.0
    %89 = vmatpush2.msra.mxu0 0.0
    %90 = vmatprep.subr.mxu0 0.0
    %91 = vmatpush2.msra.mxu0 0.0
    %92 = vmatprep.subr.mxu0 0.0
    %93 = vmatpush2.msra.mxu0 0.0
    %94 = vmatprep.subr.mxu0 0.0
    %95 = vmatpush2.msra.mxu0 0.0
    %96 = vmatprep.subr.mxu0 0.0
    %97 = vmatpush2.msra.mxu0 0.0
    %98 = vmatprep.subr.mxu0 0.0
    %99 = vmatpush2.msra.mxu0 0.0
    %100 = vmatprep.subr.mxu0 0.0
    %101 = vmatpush2.msra.mxu0 0.0
    %102 = vmatprep.subr.mxu0 0.0
    %103 = vmatpush2.msra.mxu0 0.0
    %104 = vmatprep.subr.mxu0 0.0
    %105 = vmatpush2.msra.mxu0 0.0
    %106 = vmatprep.subr.mxu0 0.0
    %107 = vmatpush2.msra.mxu0 0.0
    %108 = vmatprep.subr.mxu0 0.0
    %109 = vmatpush2.msra.mxu0 0.0
    %110 = vmatprep.subr.mxu0 0.0
    %111 = vmatpush2.msra.mxu0 0.0
    %112 = vmatprep.subr.mxu0 0.0
    %113 = vmatpush2.msra.mxu0 0.0
    %114 = vmatprep.subr.mxu0 0.0
    %115 = vmatpush2.msra.mxu0 0.0
    %116 = vmatprep.mubr.f32.mxu0 0.0
    %117 = vmatmul.mubr.f32.gmra.mxu0 %v50
    %v118 = vpop.f32.mrf.mxu0
    %v119 = vadd.f32 0.0, %v118
    %v120 = vpop.f32.mrf.mxu0
    %121 = vdwg.mxu0
    %v122 = vmul.f32 %v43, %v43
    %v123 = vsel %vm48, %v122, 0.0
    %124 = vadd.xlane.f32.xlu0 %v123
    %v125 = vpop.xlane.xlu0 %124
    %v126 = vmul.f32 %v44, %v44
    %v127 = vmul.f32 %v45, %v45
    %v128 = vmul.f32 %v46, %v46
    %v129 = vmul.f32 %v47, %v47
    %vm130 = vcmask 64512
    %v131 = vsel %vm130, %v126, 0.0
    %v132 = vsel %vm130, %v127, 0.0
    %v133 = vadd.f32 %v131, %v132
    %v134 = vsel %vm130, %v128, 0.0
    %v135 = vadd.f32 %v133, %v134
    %v136 = vsel %vm130, %v129, 0.0
    %v137 = vadd.f32 %v135, %v136
    %v138 = vrot.slane %v137, 4
    %v139 = vadd.f32 %v137, %v138
    %v140 = vrot.slane %v139, 2
    %v141 = vadd.f32 %v139, %v140
    %v142 = vrot.slane %v141, 1
    %v143 = vadd.f32 %v141, %v142
    %v144 = vmul.f32 %v125, %v143
    %v145 = vmax.f32 %v144, 1e-16
    %v146 = vrsqrt.pop %v145
    %v147 = vmul.f32 %v119, %v146
    %148 = vst.msk [vmem:[#allocation6] sm:$0xff] %vm130, %v147
    %v149 = vmul.f32 %v147, 0.1
    %v150 = vmul.f32 %v149, 1.442695
    %v151 = vpow.pop %v150
    %v152 = vsel %vm130, %v151, 0.0
    %153 = vadd.xlane.f32.xlu0 %v152
    %v154 = vpop.xlane.xlu0 %153
    %v155 = vrcp.pop %v154
    %v156 = vmul.f32 %v151, %v155
    %v157 = vpack.c.bf16 %v43, %v43
    %v158 = vld [vmem:[#allocation3] sm:$0xf]
    %v159 = vld [vmem:[#allocation3 + $0x20] sm:$0xf]
    %v160 = vld [vmem:[#allocation3 + $0x40] sm:$0xf]
    %v161 = vld [vmem:[#allocation3 + $0x60] sm:$0xf]
    %v166 = vunpack.c.l.b16 %v158
    %v167 = vunpack.c.l.b16 %v159
    %v168 = vunpack.c.l.b16 %v160
    %v169 = vunpack.c.l.b16 %v161
    %v170 = vpack.c.b16 %v167, %v166
    %v171 = vpack.c.b16 %v169, %v168
    %v175 = vsel %vm48, %v157, 0
    %177 = vmatprep.subr.bf16.mxu0 0
    %178 = vmatpush1.bf16.msra.mxu0 0
    %179 = vmatprep.subr.bf16.mxu0 0
    %180 = vmatpush1.bf16.msra.mxu0 0
    %181 = vmatprep.subr.bf16.mxu0 0
    %182 = vmatpush1.bf16.msra.mxu0 0
    %183 = vmatprep.subr.bf16.mxu0 0
    %184 = vmatpush1.bf16.msra.mxu0 0
    %185 = vmatprep.subr.bf16.mxu0 0
    %186 = vmatpush1.bf16.msra.mxu0 0
    %187 = vmatprep.subr.bf16.mxu0 0
    %188 = vmatpush1.bf16.msra.mxu0 0
    %189 = vmatprep.subr.bf16.mxu0 0
    %190 = vmatpush1.bf16.msra.mxu0 %v171
    %191 = vmatprep.subr.bf16.mxu0 0
    %192 = vmatpush1.bf16.msra.mxu0 %v170
    %193 = vmatprep.subr.bf16.mxu0 0
    %194 = vmatpush2.bf16.msra.mxu0 0
    %195 = vmatprep.subr.bf16.mxu0 0
    %196 = vmatpush2.bf16.msra.mxu0 0
    %197 = vmatprep.subr.bf16.mxu0 0
    %198 = vmatpush2.bf16.msra.mxu0 0
    %199 = vmatprep.subr.bf16.mxu0 0
    %200 = vmatpush2.bf16.msra.mxu0 0
    %201 = vmatprep.subr.bf16.mxu0 0
    %202 = vmatpush2.bf16.msra.mxu0 0
    %203 = vmatprep.subr.bf16.mxu0 0
    %204 = vmatpush2.bf16.msra.mxu0 0
    %205 = vmatprep.subr.bf16.mxu0 0
    %206 = vmatpush2.bf16.msra.mxu0 0
    %207 = vmatprep.subr.bf16.mxu0 0
    %208 = vmatpush2.bf16.msra.mxu0 0
    %209 = vmatprep.mubr.bf16.mxu0 0
    %210 = vmatmul.mubr.bf16.gmra.mxu0 %v175
    %v211 = vpop.f32.mrf.mxu0
    %v212 = vadd.f32 0.0, %v211
    %v213 = vpop.f32.mrf.mxu0
    %v214 = vpop.f32.mrf.mxu0
    %v215 = vpop.f32.mrf.mxu0
    %216 = vdwg.mxu0
    %218 = vset.pattern.permute.xlu0 0
    %219 = vperm.xlu0 %218, %v156
    %v220 = vpop.permute.xlu0 %219
    %v222 = vmul.f32 %v220, %v212
    %v223 = vld [vmem:[#allocation3 + $0x4] sm:$0xf]
    %v224 = vld [vmem:[#allocation3 + $0x24] sm:$0xf]
    %v225 = vld [vmem:[#allocation3 + $0x44] sm:$0xf]
    %v226 = vld [vmem:[#allocation3 + $0x64] sm:$0xf]
    %v231 = vunpack.c.l.b16 %v223
    %v232 = vunpack.c.l.b16 %v224
    %v233 = vunpack.c.l.b16 %v225
    %v234 = vunpack.c.l.b16 %v226
    %v235 = vpack.c.b16 %v232, %v231
    %v236 = vpack.c.b16 %v234, %v233
    %239 = vmatprep.subr.bf16.mxu0 0
    %240 = vmatpush1.bf16.msra.mxu0 0
    %241 = vmatprep.subr.bf16.mxu0 0
    %242 = vmatpush1.bf16.msra.mxu0 0
    %243 = vmatprep.subr.bf16.mxu0 0
    %244 = vmatpush1.bf16.msra.mxu0 0
    %245 = vmatprep.subr.bf16.mxu0 0
    %246 = vmatpush1.bf16.msra.mxu0 0
    %247 = vmatprep.subr.bf16.mxu0 0
    %248 = vmatpush1.bf16.msra.mxu0 0
    %249 = vmatprep.subr.bf16.mxu0 0
    %250 = vmatpush1.bf16.msra.mxu0 0
    %251 = vmatprep.subr.bf16.mxu0 0
    %252 = vmatpush1.bf16.msra.mxu0 %v236
    %253 = vmatprep.subr.bf16.mxu0 0
    %254 = vmatpush1.bf16.msra.mxu0 %v235
    %255 = vmatprep.subr.bf16.mxu0 0
    %256 = vmatpush2.bf16.msra.mxu0 0
    %257 = vmatprep.subr.bf16.mxu0 0
    %258 = vmatpush2.bf16.msra.mxu0 0
    %259 = vmatprep.subr.bf16.mxu0 0
    %260 = vmatpush2.bf16.msra.mxu0 0
    %261 = vmatprep.subr.bf16.mxu0 0
    %262 = vmatpush2.bf16.msra.mxu0 0
    %263 = vmatprep.subr.bf16.mxu0 0
    %264 = vmatpush2.bf16.msra.mxu0 0
    %265 = vmatprep.subr.bf16.mxu0 0
    %266 = vmatpush2.bf16.msra.mxu0 0
    %267 = vmatprep.subr.bf16.mxu0 0
    %268 = vmatpush2.bf16.msra.mxu0 0
    %269 = vmatprep.subr.bf16.mxu0 0
    %270 = vmatpush2.bf16.msra.mxu0 0
    %271 = vmatprep.mubr.bf16.mxu0 0
    %272 = vmatmul.mubr.bf16.gmra.mxu0 %v175
    %v273 = vpop.f32.mrf.mxu0
    %v274 = vadd.f32 0.0, %v273
    %v275 = vpop.f32.mrf.mxu0
    %v276 = vpop.f32.mrf.mxu0
    %v277 = vpop.f32.mrf.mxu0
    %278 = vdwg.mxu0
    %279 = vset.pattern.permute.xlu0 1
    %280 = vperm.xlu0 %279, %v156
    %v281 = vpop.permute.xlu0 %280
    %v283 = vmul.f32 %v281, %v274
    %v284 = vadd.f32 %v222, %v283
    %v285 = vld [vmem:[#allocation3 + $0x8] sm:$0xf]
    %v286 = vld [vmem:[#allocation3 + $0x28] sm:$0xf]
    %v287 = vld [vmem:[#allocation3 + $0x48] sm:$0xf]
    %v288 = vld [vmem:[#allocation3 + $0x68] sm:$0xf]
    %v293 = vunpack.c.l.b16 %v285
    %v294 = vunpack.c.l.b16 %v286
    %v295 = vunpack.c.l.b16 %v287
    %v296 = vunpack.c.l.b16 %v288
    %v297 = vpack.c.b16 %v294, %v293
    %v298 = vpack.c.b16 %v296, %v295
    %301 = vmatprep.subr.bf16.mxu0 0
    %302 = vmatpush1.bf16.msra.mxu0 0
    %303 = vmatprep.subr.bf16.mxu0 0
    %304 = vmatpush1.bf16.msra.mxu0 0
    %305 = vmatprep.subr.bf16.mxu0 0
    %306 = vmatpush1.bf16.msra.mxu0 0
    %307 = vmatprep.subr.bf16.mxu0 0
    %308 = vmatpush1.bf16.msra.mxu0 0
    %309 = vmatprep.subr.bf16.mxu0 0
    %310 = vmatpush1.bf16.msra.mxu0 0
    %311 = vmatprep.subr.bf16.mxu0 0
    %312 = vmatpush1.bf16.msra.mxu0 0
    %313 = vmatprep.subr.bf16.mxu0 0
    %314 = vmatpush1.bf16.msra.mxu0 %v298
    %315 = vmatprep.subr.bf16.mxu0 0
    %316 = vmatpush1.bf16.msra.mxu0 %v297
    %317 = vmatprep.subr.bf16.mxu0 0
    %318 = vmatpush2.bf16.msra.mxu0 0
    %319 = vmatprep.subr.bf16.mxu0 0
    %320 = vmatpush2.bf16.msra.mxu0 0
    %321 = vmatprep.subr.bf16.mxu0 0
    %322 = vmatpush2.bf16.msra.mxu0 0
    %323 = vmatprep.subr.bf16.mxu0 0
    %324 = vmatpush2.bf16.msra.mxu0 0
    %325 = vmatprep.subr.bf16.mxu0 0
    %326 = vmatpush2.bf16.msra.mxu0 0
    %327 = vmatprep.subr.bf16.mxu0 0
    %328 = vmatpush2.bf16.msra.mxu0 0
    %329 = vmatprep.subr.bf16.mxu0 0
    %330 = vmatpush2.bf16.msra.mxu0 0
    %331 = vmatprep.subr.bf16.mxu0 0
    %332 = vmatpush2.bf16.msra.mxu0 0
    %333 = vmatprep.mubr.bf16.mxu0 0
    %334 = vmatmul.mubr.bf16.gmra.mxu0 %v175
    %v335 = vpop.f32.mrf.mxu0
    %v336 = vadd.f32 0.0, %v335
    %v337 = vpop.f32.mrf.mxu0
    %v338 = vpop.f32.mrf.mxu0
    %v339 = vpop.f32.mrf.mxu0
    %340 = vdwg.mxu0
    %341 = vset.pattern.permute.xlu0 2
    %342 = vperm.xlu0 %341, %v156
    %v343 = vpop.permute.xlu0 %342
    %v345 = vmul.f32 %v343, %v336
    %v346 = vadd.f32 %v284, %v345
    %v347 = vld [vmem:[#allocation3 + $0xc] sm:$0xf]
    %v348 = vld [vmem:[#allocation3 + $0x2c] sm:$0xf]
    %v349 = vld [vmem:[#allocation3 + $0x4c] sm:$0xf]
    %v350 = vld [vmem:[#allocation3 + $0x6c] sm:$0xf]
    %v355 = vunpack.c.l.b16 %v347
    %v356 = vunpack.c.l.b16 %v348
    %v357 = vunpack.c.l.b16 %v349
    %v358 = vunpack.c.l.b16 %v350
    %v359 = vpack.c.b16 %v356, %v355
    %v360 = vpack.c.b16 %v358, %v357
    %363 = vmatprep.subr.bf16.mxu0 0
    %364 = vmatpush1.bf16.msra.mxu0 0
    %365 = vmatprep.subr.bf16.mxu0 0
    %366 = vmatpush1.bf16.msra.mxu0 0
    %367 = vmatprep.subr.bf16.mxu0 0
    %368 = vmatpush1.bf16.msra.mxu0 0
    %369 = vmatprep.subr.bf16.mxu0 0
    %370 = vmatpush1.bf16.msra.mxu0 0
    %371 = vmatprep.subr.bf16.mxu0 0
    %372 = vmatpush1.bf16.msra.mxu0 0
    %373 = vmatprep.subr.bf16.mxu0 0
    %374 = vmatpush1.bf16.msra.mxu0 0
    %375 = vmatprep.subr.bf16.mxu0 0
    %376 = vmatpush1.bf16.msra.mxu0 %v360
    %377 = vmatprep.subr.bf16.mxu0 0
    %378 = vmatpush1.bf16.msra.mxu0 %v359
    %379 = vmatprep.subr.bf16.mxu0 0
    %380 = vmatpush2.bf16.msra.mxu0 0
    %381 = vmatprep.subr.bf16.mxu0 0
    %382 = vmatpush2.bf16.msra.mxu0 0
    %383 = vmatprep.subr.bf16.mxu0 0
    %384 = vmatpush2.bf16.msra.mxu0 0
    %385 = vmatprep.subr.bf16.mxu0 0
    %386 = vmatpush2.bf16.msra.mxu0 0
    %387 = vmatprep.subr.bf16.mxu0 0
    %388 = vmatpush2.bf16.msra.mxu0 0
    %389 = vmatprep.subr.bf16.mxu0 0
    %390 = vmatpush2.bf16.msra.mxu0 0
    %391 = vmatprep.subr.bf16.mxu0 0
    %392 = vmatpush2.bf16.msra.mxu0 0
    %393 = vmatprep.subr.bf16.mxu0 0
    %394 = vmatpush2.bf16.msra.mxu0 0
    %395 = vmatprep.mubr.bf16.mxu0 0
    %396 = vmatmul.mubr.bf16.gmra.mxu0 %v175
    %v397 = vpop.f32.mrf.mxu0
    %v398 = vadd.f32 0.0, %v397
    %v399 = vpop.f32.mrf.mxu0
    %v400 = vpop.f32.mrf.mxu0
    %v401 = vpop.f32.mrf.mxu0
    %402 = vdwg.mxu0
    %403 = vset.pattern.permute.xlu0 3
    %404 = vperm.xlu0 %403, %v156
    %v405 = vpop.permute.xlu0 %404
    %v407 = vmul.f32 %v405, %v398
    %v408 = vadd.f32 %v346, %v407
    %v409 = vld [vmem:[#allocation3 + $0x10] sm:$0xf]
    %v410 = vld [vmem:[#allocation3 + $0x30] sm:$0xf]
    %v411 = vld [vmem:[#allocation3 + $0x50] sm:$0xf]
    %v412 = vld [vmem:[#allocation3 + $0x70] sm:$0xf]
    %v417 = vunpack.c.l.b16 %v409
    %v418 = vunpack.c.l.b16 %v410
    %v419 = vunpack.c.l.b16 %v411
    %v420 = vunpack.c.l.b16 %v412
    %v421 = vpack.c.b16 %v418, %v417
    %v422 = vpack.c.b16 %v420, %v419
    %425 = vmatprep.subr.bf16.mxu0 0
    %426 = vmatpush1.bf16.msra.mxu0 0
    %427 = vmatprep.subr.bf16.mxu0 0
    %428 = vmatpush1.bf16.msra.mxu0 0
    %429 = vmatprep.subr.bf16.mxu0 0
    %430 = vmatpush1.bf16.msra.mxu0 0
    %431 = vmatprep.subr.bf16.mxu0 0
    %432 = vmatpush1.bf16.msra.mxu0 0
    %433 = vmatprep.subr.bf16.mxu0 0
    %434 = vmatpush1.bf16.msra.mxu0 0
    %435 = vmatprep.subr.bf16.mxu0 0
    %436 = vmatpush1.bf16.msra.mxu0 0
    %437 = vmatprep.subr.bf16.mxu0 0
    %438 = vmatpush1.bf16.msra.mxu0 %v422
    %439 = vmatprep.subr.bf16.mxu0 0
    %440 = vmatpush1.bf16.msra.mxu0 %v421
    %441 = vmatprep.subr.bf16.mxu0 0
    %442 = vmatpush2.bf16.msra.mxu0 0
    %443 = vmatprep.subr.bf16.mxu0 0
    %444 = vmatpush2.bf16.msra.mxu0 0
    %445 = vmatprep.subr.bf16.mxu0 0
    %446 = vmatpush2.bf16.msra.mxu0 0
    %447 = vmatprep.subr.bf16.mxu0 0
    %448 = vmatpush2.bf16.msra.mxu0 0
    %449 = vmatprep.subr.bf16.mxu0 0
    %450 = vmatpush2.bf16.msra.mxu0 0
    %451 = vmatprep.subr.bf16.mxu0 0
    %452 = vmatpush2.bf16.msra.mxu0 0
    %453 = vmatprep.subr.bf16.mxu0 0
    %454 = vmatpush2.bf16.msra.mxu0 0
    %455 = vmatprep.subr.bf16.mxu0 0
    %456 = vmatpush2.bf16.msra.mxu0 0
    %457 = vmatprep.mubr.bf16.mxu0 0
    %458 = vmatmul.mubr.bf16.gmra.mxu0 %v175
    %v459 = vpop.f32.mrf.mxu0
    %v460 = vadd.f32 0.0, %v459
    %v461 = vpop.f32.mrf.mxu0
    %v462 = vpop.f32.mrf.mxu0
    %v463 = vpop.f32.mrf.mxu0
    %464 = vdwg.mxu0
    %465 = vset.pattern.permute.xlu0 4
    %466 = vperm.xlu0 %465, %v156
    %v467 = vpop.permute.xlu0 %466
    %v469 = vmul.f32 %v467, %v460
    %v470 = vadd.f32 %v408, %v469
    %v471 = vld [vmem:[#allocation3 + $0x14] sm:$0xf]
    %v472 = vld [vmem:[#allocation3 + $0x34] sm:$0xf]
    %v473 = vld [vmem:[#allocation3 + $0x54] sm:$0xf]
    %v474 = vld [vmem:[#allocation3 + $0x74] sm:$0xf]
    %v479 = vunpack.c.l.b16 %v471
    %v480 = vunpack.c.l.b16 %v472
    %v481 = vunpack.c.l.b16 %v473
    %v482 = vunpack.c.l.b16 %v474
    %v483 = vpack.c.b16 %v480, %v479
    %v484 = vpack.c.b16 %v482, %v481
    %487 = vmatprep.subr.bf16.mxu0 0
    %488 = vmatpush1.bf16.msra.mxu0 0
    %489 = vmatprep.subr.bf16.mxu0 0
    %490 = vmatpush1.bf16.msra.mxu0 0
    %491 = vmatprep.subr.bf16.mxu0 0
    %492 = vmatpush1.bf16.msra.mxu0 0
    %493 = vmatprep.subr.bf16.mxu0 0
    %494 = vmatpush1.bf16.msra.mxu0 0
    %495 = vmatprep.subr.bf16.mxu0 0
    %496 = vmatpush1.bf16.msra.mxu0 0
    %497 = vmatprep.subr.bf16.mxu0 0
    %498 = vmatpush1.bf16.msra.mxu0 0
    %499 = vmatprep.subr.bf16.mxu0 0
    %500 = vmatpush1.bf16.msra.mxu0 %v484
    %501 = vmatprep.subr.bf16.mxu0 0
    %502 = vmatpush1.bf16.msra.mxu0 %v483
    %503 = vmatprep.subr.bf16.mxu0 0
    %504 = vmatpush2.bf16.msra.mxu0 0
    %505 = vmatprep.subr.bf16.mxu0 0
    %506 = vmatpush2.bf16.msra.mxu0 0
    %507 = vmatprep.subr.bf16.mxu0 0
    %508 = vmatpush2.bf16.msra.mxu0 0
    %509 = vmatprep.subr.bf16.mxu0 0
    %510 = vmatpush2.bf16.msra.mxu0 0
    %511 = vmatprep.subr.bf16.mxu0 0
    %512 = vmatpush2.bf16.msra.mxu0 0
    %513 = vmatprep.subr.bf16.mxu0 0
    %514 = vmatpush2.bf16.msra.mxu0 0
    %515 = vmatprep.subr.bf16.mxu0 0
    %516 = vmatpush2.bf16.msra.mxu0 0
    %517 = vmatprep.subr.bf16.mxu0 0
    %518 = vmatpush2.bf16.msra.mxu0 0
    %519 = vmatprep.mubr.bf16.mxu0 0
    %520 = vmatmul.mubr.bf16.gmra.mxu0 %v175
    %v521 = vpop.f32.mrf.mxu0
    %v522 = vadd.f32 0.0, %v521
    %v523 = vpop.f32.mrf.mxu0
    %v524 = vpop.f32.mrf.mxu0
    %v525 = vpop.f32.mrf.mxu0
    %526 = vdwg.mxu0
    %527 = vset.pattern.permute.xlu0 5
    %528 = vperm.xlu0 %527, %v156
    %v529 = vpop.permute.xlu0 %528
    %v531 = vmul.f32 %v529, %v522
    %v532 = vadd.f32 %v470, %v531
    %v533 = vld [vmem:[#allocation3 + $0x18] sm:$0xf]
    %v534 = vld [vmem:[#allocation3 + $0x38] sm:$0xf]
    %v535 = vld [vmem:[#allocation3 + $0x58] sm:$0xf]
    %v536 = vld [vmem:[#allocation3 + $0x78] sm:$0xf]
    %v541 = vunpack.c.l.b16 %v533
    %v542 = vunpack.c.l.b16 %v534
    %v543 = vunpack.c.l.b16 %v535
    %v544 = vunpack.c.l.b16 %v536
    %v545 = vpack.c.b16 %v542, %v541
    %v546 = vpack.c.b16 %v544, %v543
    %549 = vmatprep.subr.bf16.mxu0 0
    %550 = vmatpush1.bf16.msra.mxu0 0
    %551 = vmatprep.subr.bf16.mxu0 0
    %552 = vmatpush1.bf16.msra.mxu0 0
    %553 = vmatprep.subr.bf16.mxu0 0
    %554 = vmatpush1.bf16.msra.mxu0 0
    %555 = vmatprep.subr.bf16.mxu0 0
    %556 = vmatpush1.bf16.msra.mxu0 0
    %557 = vmatprep.subr.bf16.mxu0 0
    %558 = vmatpush1.bf16.msra.mxu0 0
    %559 = vmatprep.subr.bf16.mxu0 0
    %560 = vmatpush1.bf16.msra.mxu0 0
    %561 = vmatprep.subr.bf16.mxu0 0
    %562 = vmatpush1.bf16.msra.mxu0 %v546
    %563 = vmatprep.subr.bf16.mxu0 0
    %564 = vmatpush1.bf16.msra.mxu0 %v545
    %565 = vmatprep.subr.bf16.mxu0 0
    %566 = vmatpush2.bf16.msra.mxu0 0
    %567 = vmatprep.subr.bf16.mxu0 0
    %568 = vmatpush2.bf16.msra.mxu0 0
    %569 = vmatprep.subr.bf16.mxu0 0
    %570 = vmatpush2.bf16.msra.mxu0 0
    %571 = vmatprep.subr.bf16.mxu0 0
    %572 = vmatpush2.bf16.msra.mxu0 0
    %573 = vmatprep.subr.bf16.mxu0 0
    %574 = vmatpush2.bf16.msra.mxu0 0
    %575 = vmatprep.subr.bf16.mxu0 0
    %576 = vmatpush2.bf16.msra.mxu0 0
    %577 = vmatprep.subr.bf16.mxu0 0
    %578 = vmatpush2.bf16.msra.mxu0 0
    %579 = vmatprep.subr.bf16.mxu0 0
    %580 = vmatpush2.bf16.msra.mxu0 0
    %581 = vmatprep.mubr.bf16.mxu0 0
    %582 = vmatmul.mubr.bf16.gmra.mxu0 %v175
    %v583 = vpop.f32.mrf.mxu0
    %v584 = vadd.f32 0.0, %v583
    %v585 = vpop.f32.mrf.mxu0
    %v586 = vpop.f32.mrf.mxu0
    %v587 = vpop.f32.mrf.mxu0
    %588 = vdwg.mxu0
    %589 = vset.pattern.permute.xlu0 6
    %590 = vperm.xlu0 %589, %v156
    %v591 = vpop.permute.xlu0 %590
    %v593 = vmul.f32 %v591, %v584
    %v594 = vadd.f32 %v532, %v593
    %v595 = vld [vmem:[#allocation3 + $0x1c] sm:$0xf]
    %v596 = vld [vmem:[#allocation3 + $0x3c] sm:$0xf]
    %v597 = vld [vmem:[#allocation3 + $0x5c] sm:$0xf]
    %v598 = vld [vmem:[#allocation3 + $0x7c] sm:$0xf]
    %v603 = vunpack.c.l.b16 %v595
    %v604 = vunpack.c.l.b16 %v596
    %v605 = vunpack.c.l.b16 %v597
    %v606 = vunpack.c.l.b16 %v598
    %v607 = vpack.c.b16 %v604, %v603
    %v608 = vpack.c.b16 %v606, %v605
    %611 = vmatprep.subr.bf16.mxu0 0
    %612 = vmatpush1.bf16.msra.mxu0 0
    %613 = vmatprep.subr.bf16.mxu0 0
    %614 = vmatpush1.bf16.msra.mxu0 0
    %615 = vmatprep.subr.bf16.mxu0 0
    %616 = vmatpush1.bf16.msra.mxu0 0
    %617 = vmatprep.subr.bf16.mxu0 0
    %618 = vmatpush1.bf16.msra.mxu0 0
    %619 = vmatprep.subr.bf16.mxu0 0
    %620 = vmatpush1.bf16.msra.mxu0 0
    %621 = vmatprep.subr.bf16.mxu0 0
    %622 = vmatpush1.bf16.msra.mxu0 0
    %623 = vmatprep.subr.bf16.mxu0 0
    %624 = vmatpush1.bf16.msra.mxu0 %v608
    %625 = vmatprep.subr.bf16.mxu0 0
    %626 = vmatpush1.bf16.msra.mxu0 %v607
    %627 = vmatprep.subr.bf16.mxu0 0
    %628 = vmatpush2.bf16.msra.mxu0 0
    %629 = vmatprep.subr.bf16.mxu0 0
    %630 = vmatpush2.bf16.msra.mxu0 0
    %631 = vmatprep.subr.bf16.mxu0 0
    %632 = vmatpush2.bf16.msra.mxu0 0
    %633 = vmatprep.subr.bf16.mxu0 0
    %634 = vmatpush2.bf16.msra.mxu0 0
    %635 = vmatprep.subr.bf16.mxu0 0
    %636 = vmatpush2.bf16.msra.mxu0 0
    %637 = vmatprep.subr.bf16.mxu0 0
    %638 = vmatpush2.bf16.msra.mxu0 0
    %639 = vmatprep.subr.bf16.mxu0 0
    %640 = vmatpush2.bf16.msra.mxu0 0
    %641 = vmatprep.subr.bf16.mxu0 0
    %642 = vmatpush2.bf16.msra.mxu0 0
    %643 = vmatprep.mubr.bf16.mxu0 0
    %644 = vmatmul.mubr.bf16.gmra.mxu0 %v175
    %v645 = vpop.f32.mrf.mxu0
    %v646 = vadd.f32 0.0, %v645
    %v647 = vpop.f32.mrf.mxu0
    %v648 = vpop.f32.mrf.mxu0
    %v649 = vpop.f32.mrf.mxu0
    %650 = vdwg.mxu0
    %651 = vset.pattern.permute.xlu0 7
    %652 = vperm.xlu0 %651, %v156
    %v653 = vpop.permute.xlu0 %652
    %v655 = vmul.f32 %v653, %v646
    %v656 = vadd.f32 %v594, %v655
    %v657 = vpack.c.bf16 %v156, %v156
    %v658 = vld [vmem:[%s3] sm:$0xf]
    %v660 = vsel %vm130, %v657, 0
    %vm662 = vcmask 1043456
    %v664 = vsel %vm662, %v658, 0
    %666 = vmatprep.subr.bf16.mxu0 0
    %667 = vmatpush1.bf16.msra.mxu0 0
    %668 = vmatprep.subr.bf16.mxu0 0
    %669 = vmatpush1.bf16.msra.mxu0 0
    %670 = vmatprep.subr.bf16.mxu0 0
    %671 = vmatpush1.bf16.msra.mxu0 0
    %672 = vmatprep.subr.bf16.mxu0 0
    %673 = vmatpush1.bf16.msra.mxu0 0
    %674 = vmatprep.subr.bf16.mxu0 0
    %675 = vmatpush1.bf16.msra.mxu0 0
    %676 = vmatprep.subr.bf16.mxu0 0
    %677 = vmatpush1.bf16.msra.mxu0 0
    %678 = vmatprep.subr.bf16.mxu0 0
    %679 = vmatpush1.bf16.msra.mxu0 0
    %680 = vmatprep.subr.bf16.mxu0 0
    %681 = vmatpush1.bf16.msra.mxu0 %v664
    %682 = vmatprep.subr.bf16.mxu0 0
    %683 = vmatpush2.bf16.msra.mxu0 0
    %684 = vmatprep.subr.bf16.mxu0 0
    %685 = vmatpush2.bf16.msra.mxu0 0
    %686 = vmatprep.subr.bf16.mxu0 0
    %687 = vmatpush2.bf16.msra.mxu0 0
    %688 = vmatprep.subr.bf16.mxu0 0
    %689 = vmatpush2.bf16.msra.mxu0 0
    %690 = vmatprep.subr.bf16.mxu0 0
    %691 = vmatpush2.bf16.msra.mxu0 0
    %692 = vmatprep.subr.bf16.mxu0 0
    %693 = vmatpush2.bf16.msra.mxu0 0
    %694 = vmatprep.subr.bf16.mxu0 0
    %695 = vmatpush2.bf16.msra.mxu0 0
    %696 = vmatprep.subr.bf16.mxu0 0
    %697 = vmatpush2.bf16.msra.mxu0 0
    %698 = vmatprep.mubr.bf16.mxu0 0
    %699 = vmatmul.mubr.bf16.gmra.mxu0 %v660
    %v700 = vpop.f32.mrf.mxu0
    %v701 = vadd.f32 0.0, %v700
    %v702 = vpop.f32.mrf.mxu0
    %v703 = vpop.f32.mrf.mxu0
    %v704 = vpop.f32.mrf.mxu0
    %705 = vdwg.mxu0
    %v706 = vadd.f32 %v43, %v701
    %v707 = vadd.f32 %v706, %v656
    %708 = vst.msk [vmem:[#allocation7] sm:$0xff] %vm48, %v707
    %v709 = vld [vmem:[%s4] sm:$0x1]
    %v711 = vlaneseq
    %v712 = vshrl.u32 %v711, 7
    %v713 = vsub.s32 0, %v712
    %v714 = vrot.slane %v709, %v713
    %v716 = vmul.f32 %v707, %v714
    %v717 = vsel %vm48, %v716, 0.0
    %718 = vadd.xlane.f32.xlu0 %v717
    %v719 = vpop.xlane.xlu0 %718
    %s720 = sld [smem:[#allocation2]]
    %v721 = vstv %s720
    %v722 = vadd.f32 %v719, %v721
    %vm723 = vcmask 72768
    %724 = vst.msk [vmem:[#allocation6] sm:$0xff] %vm723, %v722
    // Predicated region
    $region30: #{tpu_custom_call.1} parent=1 // pred_check
      _
    $region31: #{tpu_custom_call.1} parent=1 // pred_check_branch
      %726 = sbr.rel (0) target = $region33
    $region32: #{tpu_custom_call.1} parent=1 // pred_region
      %s728 = ssub.s32 128, 128
      %729 = vsyncadd [#allocation5], %s728
      %s731 = sshll.u32 [#allocation6], 4
      %s732 = int_to_ptr.vmem [resolvable:$true] %s731
      %734 = dma.vmem_to_hbm [thread:$0]  %s732, 128, %s6, [#allocation5]
    $region33: #{tpu_custom_call.1} parent=1 // pred_fallthru
      _
    // Predicated region
    $region34: #{tpu_custom_call.1} parent=1 // pred_check
      _
    $region35: #{tpu_custom_call.1} parent=1 // pred_check_branch
      %736 = sbr.rel (0) target = $region37
    $region36: #{tpu_custom_call.1} parent=1 // pred_region
      %s738 = ssub.s32 128, 128
      %739 = vsyncadd [#allocation8], %s738
      %s741 = sshll.u32 [#allocation7], 4
      %s742 = int_to_ptr.vmem [resolvable:$true] %s741
      %744 = dma.vmem_to_hbm [thread:$0]  %s742, 128, %s7, [#allocation8]
    $region37: #{tpu_custom_call.1} parent=1 // pred_fallthru
      _
    // Predicated region
    $region38: #{tpu_custom_call.1} parent=1 // pred_check
      _
    $region39: #{tpu_custom_call.1} parent=1 // pred_check_branch
      %746 = sbr.rel (0) target = $region41
    $region40: #{tpu_custom_call.1} parent=1 // pred_region
      %747 = dma.done [#allocation5], 128
    $region41: #{tpu_custom_call.1} parent=1 // pred_fallthru
      _
    // Predicated region
    $region42: #{tpu_custom_call.1} parent=1 // pred_check
      _
    $region43: #{tpu_custom_call.1} parent=1 // pred_check_branch
      %749 = sbr.rel (0) target = $region45
    $region44: #{tpu_custom_call.1} parent=1 // pred_region
      %750 = dma.done [#allocation8], 128
    $region45: #{tpu_custom_call.1} parent=1 // pred_fallthru
      _
    %751 = vsyncpa [#allocation4], 1
    %752 = vsyncpa [#allocation5], 1
    %753 = vsyncpa [#allocation8], 1

</llo_original>
